<compile_context>
chip_gen: v7x
topology: tpu7x:2x2x1
jax: 0.10.0
libtpu: 0.0.40
codegen_flags: <defaults>
</compile_context>

<pallas_src>
import jax
import jax.numpy as jnp
from jax.experimental import pallas as pl
from jax.experimental.pallas import tpu as pltpu


def _copy_kernel(x_ref, o_ref):
    # Identity copy of one lane-dense (tn, tc) tile. No reshape, no relayout:
    # both load and store are full unmasked vld/vst on 128-lane-aligned tiles
    # (or full-array dims when the array is too small to align).
    o_ref[...] = x_ref[...]


def _resolve_dim(d, ndim):
    return d + ndim if d < 0 else d


def _pick_tile(dim, align, max_tile):
    """Largest multiple of `align` that divides `dim` and is <= max_tile.

    Falls back to the full dimension when `dim` is not a multiple of `align`
    (block_shape == full array dim satisfies the TPU tiling constraint)."""
    if dim % align != 0:
        return dim
    best = align
    cap = min(dim, max(align, max_tile))
    t = align
    while t <= cap:
        if dim % t == 0:
            best = t
        t += align
    return best


def _tiled_copy_2d(x2):
    """Tiled lane-dense identity copy of a 2-D array through a Pallas kernel."""
    rows, cols = x2.shape
    itemsize = jnp.dtype(x2.dtype).itemsize

    # ~2 MiB per operand block: 2 operands x 2 double-buffers x 2 MiB = 8 MiB,
    # comfortably under the default scoped VMEM on every generation (incl. v5e).
    budget_bytes = 2 * 1024 * 1024

    tn = _pick_tile(rows, 8, 256)                       # sublane-aligned row tile
    max_tc = max(128, (budget_bytes // max(1, tn * itemsize)) // 128 * 128)
    tc = _pick_tile(cols, 128, max_tc)                  # lane-dense feature tile

    grid = (rows // tn, cols // tc)

    return pl.pallas_call(
        _copy_kernel,
        out_shape=jax.ShapeDtypeStruct((rows, cols), x2.dtype),
        grid=grid,
        in_specs=[pl.BlockSpec((tn, tc), lambda i, j: (i, j))],
        out_specs=pl.BlockSpec((tn, tc), lambda i, j: (i, j)),
        compiler_params=pltpu.CompilerParams(
            # Pure copy, no reduction axis -> everything is parallel
            # (enables megacore sharding on v7x; free on v5e/v6e).
            dimension_semantics=("parallel", "parallel"),
        ),
    )(x2)


def flatten(x, start_dim=1, end_dim=-1):
    """Pallas/JAX equivalent of torch.nn.Flatten(start_dim, end_dim)."""
    ndim = x.ndim
    s = _resolve_dim(start_dim, ndim)
    e = _resolve_dim(end_dim, ndim)
    assert 0 <= s <= e < ndim, "invalid start_dim/end_dim"

    flat = 1
    for d in x.shape[s:e + 1]:
        flat *= d
    out_shape = x.shape[:s] + (flat,) + x.shape[e + 1:]

    if out_shape == x.shape:
        # start_dim == end_dim: nothing to flatten -> no kernel launch.
        return x

    # Metadata-only reshape to a 2-D lane-dense view (free in XLA): collapse all
    # leading output dims into "rows" and keep the last output dim as "cols".
    rows = 1
    for d in out_shape[:-1]:
        rows *= d
    cols = out_shape[-1]
    x2 = jnp.reshape(x, (rows, cols))

    # Materialize through the tiled Pallas copy kernel, then view as out_shape
    # (again metadata-only).
    y2 = _tiled_copy_2d(x2)
    return jnp.reshape(y2, out_shape)


class Flatten:
    """JAX/Pallas port of DeepRead's Flatten block (no parameters)."""

    def __init__(self, start_dim, end_dim):
        self.start_dim = start_dim
        self.end_dim = end_dim

    def __call__(self, x):
        return flatten(x, self.start_dim, self.end_dim)


if __name__ == "__main__":
    key = jax.random.PRNGKey(0)
    # NCHW input, flatten everything after the batch dim (typical m6Anet usage:
    # Flatten(start_dim=1, end_dim=-1)).
    x = jax.random.normal(key, (2, 4, 16, 16), dtype=jnp.float32)

    mod = Flatten(start_dim=1, end_dim=-1)
    y = mod(x)
    y = jax.block_until_ready(y)

    # Correctness check against plain JAX reshape (same semantics as torch.flatten).
    y_ref = x.reshape(2, 4 * 16 * 16)
    assert y.shape == (2, 1024), y.shape
    assert y.dtype == x.dtype
    assert jnp.array_equal(y, y_ref)

    # Also check a partial flatten (start_dim=2, end_dim=3) -> (2, 4, 256).
    mod2 = Flatten(start_dim=2, end_dim=3)
    y2 = jax.block_until_ready(mod2(x))
    assert y2.shape == (2, 4, 256), y2.shape
    assert jnp.array_equal(y2, x.reshape(2, 4, 256))

    print("KERNEL_OK")
</pallas_src>

<mosaic_0001>
module attributes {stable_mosaic.version = 11 : i64} {
  func.func @_copy_kernel(%arg0: i32, %arg1: i32, %arg2: memref<2x1024xf32, #tpu.memory_space<vmem>>, %arg3: memref<2x1024xf32, #tpu.memory_space<vmem>>) attributes {dimension_semantics = [#tpu.dimension_semantics<parallel>, #tpu.dimension_semantics<parallel>], iteration_bounds = array<i64: 1, 1>, scalar_prefetch = 0 : i64, scratch_operands = 0 : i64, tpu.core_type = #tpu.core_type<tc>, window_params = [{transform_indices = @transform_0, window_bounds = array<i64: 2, 1024>}, {transform_indices = @transform_1, window_bounds = array<i64: 2, 1024>}]} {
    %c0 = arith.constant 0 : index
    %c0_0 = arith.constant 0 : index
    %0 = vector.load %arg2[%c0, %c0_0] : memref<2x1024xf32, #tpu.memory_space<vmem>>, vector<2x1024xf32>
    %c0_1 = arith.constant 0 : index
    %c0_2 = arith.constant 0 : index
    %1 = vector.load %arg3[%c0_1, %c0_2] : memref<2x1024xf32, #tpu.memory_space<vmem>>, vector<2x1024xf32>
    tpu.vector_store %arg3[%c0_1, %c0_2], %0 {strides = array<i32>} : memref<2x1024xf32, #tpu.memory_space<vmem>>, vector<2x1024xf32>,
    return
  }
  func.func @transform_0(%arg0: i32, %arg1: i32) -> (i32, i32) {
    %c0_i32 = arith.constant 0 : i32
    return %arg0, %arg1 : i32, i32
  }
  func.func @transform_1(%arg0: i32, %arg1: i32) -> (i32, i32) {
    %c0_i32 = arith.constant 0 : i32
    return %arg0, %arg1 : i32, i32
  }
}

</mosaic_0001>

<llo_original>
// kernel: tpu_custom_call.1
$region0: #{tpu_custom_call.1}
  #allocation0 [shape = 'u32[]', space=smem, size = 0x4, offset = 0x4, fixed_abs, tag = 'smem constant byte address 0x4 - core index']
  #allocation1 [shape = 'u32[144,128]{1,0:T(1,128)}', space=vmem, size = 0x12000, scoped, tag = 'internal scratch']
  %s0 = inlined_call_operand.hbm [shape: f32[2,1024], index: 0, kind: input, shape index: {}]
  %s1 = inlined_call_operand.hbm [shape: f32[2,1024], index: 1, kind: output, shape index: {}]
  %s2 = sld [smem:[#allocation0]]
  $region18: #{tpu_custom_call.1} parent=0
    _
  %s4 = ssub.s32 1, %s2
  %s5 = scalar_select 0, %s4, %s2
  $region1: #{tpu_custom_call.1} parent=0
    #allocation2 [shape = 'u8[8192]{0}', space=vmem, size = 0x2000, scoped, tag = 'input window, operand 0, single buffered']
    #allocation3 [shape = 's32[1]{0}', space=sflag, size = 0x4, scoped, tag = 'scoped memory for tpu_custom_call.1']
    #allocation4 [shape = 's32[1]{0}', space=sflag, size = 0x4, scoped, tag = 'scoped memory for tpu_custom_call.1']
    #allocation5 [shape = 'u8[8192]{0}', space=vmem, size = 0x2000, scoped, tag = 'output window, operand 0, single buffered']
    %6 = vsyncpa [#allocation3], 0
    %7 = vsyncpa [#allocation4], 0
    // Predicated region
    $region2: #{tpu_custom_call.1} parent=1 // pred_check
      _
    $region3: #{tpu_custom_call.1} parent=1 // pred_check_branch
      %9 = sbr.rel (0) target = $region5
    $region4: #{tpu_custom_call.1} parent=1 // pred_region
      %s11 = ssub.s32 256, 256
      %12 = vsyncadd [#allocation3], %s11
      %s14 = sshll.u32 [#allocation2], 4
      %s15 = int_to_ptr.vmem [resolvable:$true] %s14
      %17 = dma.hbm_to_vmem [thread:$0]  %s0, 256, %s15, [#allocation3]
    $region5: #{tpu_custom_call.1} parent=1 // pred_fallthru
      _
    // Predicated region
    $region6: #{tpu_custom_call.1} parent=1 // pred_check
      _
    $region7: #{tpu_custom_call.1} parent=1 // pred_check_branch
      %19 = sbr.rel (0) target = $region9
    $region8: #{tpu_custom_call.1} parent=1 // pred_region
      %20 = dma.done [#allocation3], 256
    $region9: #{tpu_custom_call.1} parent=1 // pred_fallthru
      _
    %v21 = vld [vmem:[#allocation2] sm:$0xff]
    %v22 = vld [vmem:[#allocation2 + $0x8] sm:$0xff]
    %23 = vst [vmem:[#allocation5] sm:$0xff] %v21
    %24 = vst [vmem:[#allocation5 + $0x8] sm:$0xff] %v22
    // Predicated region
    $region10: #{tpu_custom_call.1} parent=1 // pred_check
      _
    $region11: #{tpu_custom_call.1} parent=1 // pred_check_branch
      %26 = sbr.rel (0) target = $region13
    $region12: #{tpu_custom_call.1} parent=1 // pred_region
      %s28 = ssub.s32 256, 256
      %29 = vsyncadd [#allocation4], %s28
      %s31 = sshll.u32 [#allocation5], 4
      %s32 = int_to_ptr.vmem [resolvable:$true] %s31
      %34 = dma.vmem_to_hbm [thread:$0]  %s32, 256, %s1, [#allocation4]
    $region13: #{tpu_custom_call.1} parent=1 // pred_fallthru
      _
    // Predicated region
    $region14: #{tpu_custom_call.1} parent=1 // pred_check
      _
    $region15: #{tpu_custom_call.1} parent=1 // pred_check_branch
      %36 = sbr.rel (0) target = $region17
    $region16: #{tpu_custom_call.1} parent=1 // pred_region
      %37 = dma.done [#allocation4], 256
    $region17: #{tpu_custom_call.1} parent=1 // pred_fallthru
      _
    %38 = vsyncpa [#allocation3], 1
    %39 = vsyncpa [#allocation4], 1

</llo_original>
